<compile_context>
chip_gen: v5e
topology: v5e:2x2
jax: 0.10.0
libtpu: 0.0.40
codegen_flags: <defaults>
</compile_context>

<pallas_src>
import jax
import jax.numpy as jnp
from jax.experimental import pallas as pl
from jax.experimental.pallas import tpu as pltpu


def _copy_kernel(x_ref, o_ref):
    # Identity copy of one lane-dense tile; the reshape itself is metadata.
    o_ref[...] = x_ref[...]


def _resolve_shape(total, shape):
    """Resolve a single -1 in `shape` exactly like torch.Tensor.view does."""
    shape = list(shape)
    if -1 in shape:
        idx = shape.index(-1)
        known = 1
        for i, s in enumerate(shape):
            if i != idx:
                known *= s
        if known == 0 or total % known != 0:
            raise ValueError(f"cannot resolve -1 in target shape {shape}")
        shape[idx] = total // known
    prod = 1
    for s in shape:
        prod *= s
    if prod != total:
        raise ValueError(f"target shape {shape} incompatible with {total} elements")
    return tuple(shape)


# ~4 MiB blocks: with double-buffered input and output (~4x the block) this
# stays well inside v7x's 64 MiB physical / 32 MiB scoped VMEM, and is large
# enough to amortize the ~600-cycle per-grid-step overhead on v5e/v6e.
_DEFAULT_BLOCK_BYTES = 4 * 1024 * 1024


def _materializing_copy(x, max_block_bytes=_DEFAULT_BLOCK_BYTES):
    """Identity copy of the flattened contiguous data via a tiled Pallas kernel."""
    total = x.size

    # Lane-dense slab width: widest multiple of 128 dividing the element count.
    cols = None
    for c in (2048, 1024, 512, 256, 128):
        if total % c == 0:
            cols = c
            break
    if cols is None:
        # TODO(synk): element count not a multiple of 128 — no lane-dense tiling;
        # the reshape is metadata-only anyway, so skip the copy kernel.
        return x

    rows = total // cols
    flat = x.reshape(rows, cols)  # free: contiguous row-major reinterpretation

    bytes_per_row = cols * flat.dtype.itemsize
    max_tr = max(1, max_block_bytes // bytes_per_row)
    if max_tr >= rows or rows <= 8:
        tr = rows                        # single block == full array dims (legal)
    else:
        tr = max(8, (max_tr // 8) * 8)   # multiple of 8 for the (8,128) rule

    out = pl.pallas_call(
        _copy_kernel,
        out_shape=jax.ShapeDtypeStruct((rows, cols), flat.dtype),
        grid_spec=pl.GridSpec(
            grid=(pl.cdiv(rows, tr),),
            in_specs=[pl.BlockSpec((tr, cols), lambda i: (i, 0))],
            out_specs=pl.BlockSpec((tr, cols), lambda i: (i, 0)),
        ),
        compiler_params=pltpu.CompilerParams(
            # Independent row tiles: shard across both TensorCores on v7x.
            dimension_semantics=("parallel",),
        ),
    )(flat)
    return out


def reshape_layer(x, shape, materialize=False, max_block_bytes=_DEFAULT_BLOCK_BYTES):
    """Pallas equivalent of ReshapeLayer(shape)(x) == x.view(*shape).

    materialize=False (default): metadata-only reshape, zero HBM traffic.
    materialize=True           : force a fresh buffer via the tiled copy kernel.
    """
    total = x.size
    tgt = _resolve_shape(total, shape)
    if not materialize:
        # .view() on contiguous data is free — recommended hot path.
        return x.reshape(tgt)
    out = _materializing_copy(x, max_block_bytes=max_block_bytes)
    return out.reshape(tgt)  # final metadata reshape (free)


if __name__ == "__main__":
    key = jax.random.PRNGKey(0)
    k1, k2, k3 = jax.random.split(key, 3)

    # --- Test 1: typical DCGAN discriminator flatten: NCHW -> (B, C*H*W) ---
    B, C, H, W = 2, 4, 16, 16
    x = jax.random.normal(k1, (B, C, H, W), dtype=jnp.float32)
    ref = x.reshape(B, C * H * W)

    out_meta = reshape_layer(x, (-1, C * H * W))                     # free path
    out_copy = reshape_layer(x, (-1, C * H * W), materialize=True)   # Pallas copy
    out_copy = jax.block_until_ready(out_copy)
    assert out_meta.shape == (B, C * H * W) and out_copy.shape == (B, C * H * W)
    assert out_copy.dtype == x.dtype
    assert bool(jnp.all(out_meta == ref))
    assert bool(jnp.all(out_copy == ref))

    # --- Test 2: generator-side view (B, nz) -> (B, nz, 1, 1): target last dim
    #             is 1, but the kernel's slab stays lane-dense (cols >= 128). ---
    nz = 512
    z = jax.random.normal(k2, (2, nz), dtype=jnp.float32)
    out_z = jax.block_until_ready(reshape_layer(z, (-1, nz, 1, 1), materialize=True))
    assert out_z.shape == (2, nz, 1, 1)
    assert bool(jnp.all(out_z == z.reshape(2, nz, 1, 1)))

    # --- Test 3: exercise the multi-block pipelined path (tiny block budget). ---
    x3 = jax.random.normal(k3, (8, 16, 32, 32), dtype=jnp.float32)
    out3 = reshape_layer(x3, (8, -1), materialize=True, max_block_bytes=64 * 1024)
    out3 = jax.block_until_ready(out3)
    assert out3.shape == (8, 16 * 32 * 32)
    assert bool(jnp.all(out3 == x3.reshape(8, -1)))

    print("KERNEL_OK")
</pallas_src>

<mosaic_0001>
module attributes {stable_mosaic.version = 11 : i64} {
  func.func @_copy_kernel(%arg0: i32, %arg1: memref<1x2048xf32, #tpu.memory_space<vmem>>, %arg2: memref<1x2048xf32, #tpu.memory_space<vmem>>) attributes {dimension_semantics = [#tpu.dimension_semantics<parallel>], iteration_bounds = array<i64: 1>, scalar_prefetch = 0 : i64, scratch_operands = 0 : i64, tpu.core_type = #tpu.core_type<tc>, window_params = [{transform_indices = @transform_0, window_bounds = array<i64: 1, 2048>}, {transform_indices = @transform_1, window_bounds = array<i64: 1, 2048>}]} {
    %c0 = arith.constant 0 : index
    %c0_0 = arith.constant 0 : index
    %0 = vector.load %arg1[%c0, %c0_0] : memref<1x2048xf32, #tpu.memory_space<vmem>>, vector<1x2048xf32>
    %c0_1 = arith.constant 0 : index
    %c0_2 = arith.constant 0 : index
    %1 = vector.load %arg2[%c0_1, %c0_2] : memref<1x2048xf32, #tpu.memory_space<vmem>>, vector<1x2048xf32>
    tpu.vector_store %arg2[%c0_1, %c0_2], %0 {strides = array<i32>} : memref<1x2048xf32, #tpu.memory_space<vmem>>, vector<1x2048xf32>,
    return
  }
  func.func @transform_0(%arg0: i32) -> (i32, i32) {
    %c0_i32 = arith.constant 0 : i32
    %c0_i32_0 = arith.constant 0 : i32
    return %arg0, %c0_i32 : i32, i32
  }
  func.func @transform_1(%arg0: i32) -> (i32, i32) {
    %c0_i32 = arith.constant 0 : i32
    %c0_i32_0 = arith.constant 0 : i32
    return %arg0, %c0_i32 : i32, i32
  }
}

</mosaic_0001>

<llo_original>
// kernel: tpu_custom_call.1
$region0: #{tpu_custom_call.1}
  #allocation0 [shape = 'u32[]', space=smem, size = 0x4, offset = 0x4, fixed_abs, tag = 'smem constant byte address 0x4 - core index']
  #allocation1 [shape = 'u32[72,128]{1,0:T(1,128)}', space=vmem, size = 0x9000, scoped, tag = 'internal scratch']
  %s0 = inlined_call_operand.hbm [shape: f32[1,2048], index: 0, kind: input, shape index: {}]
  %s1 = inlined_call_operand.hbm [shape: f32[1,2048], index: 1, kind: output, shape index: {}]
  %s2 = sld [smem:[#allocation0]]
  $region18: #{tpu_custom_call.1} parent=0
    _
  %s4 = ssub.s32 1, %s2
  %s5 = scalar_select 0, %s4, %s2
  $region1: #{tpu_custom_call.1} parent=0
    #allocation2 [shape = 'u8[8192]{0}', space=vmem, size = 0x2000, scoped, tag = 'input window, operand 0, single buffered']
    #allocation3 [shape = 's32[1]{0}', space=sflag, size = 0x4, scoped, tag = 'scoped memory for tpu_custom_call.1']
    #allocation4 [shape = 's32[1]{0}', space=sflag, size = 0x4, scoped, tag = 'scoped memory for tpu_custom_call.1']
    #allocation5 [shape = 'u8[8192]{0}', space=vmem, size = 0x2000, scoped, tag = 'output window, operand 0, single buffered']
    %6 = vsyncpa [#allocation3], 0
    %7 = vsyncpa [#allocation4], 0
    // Predicated region
    $region2: #{tpu_custom_call.1} parent=1 // pred_check
      _
    $region3: #{tpu_custom_call.1} parent=1 // pred_check_branch
      %9 = sbr.rel (0) target = $region5
    $region4: #{tpu_custom_call.1} parent=1 // pred_region
      %11 = vsyncadd [#allocation3], 0
      %s13 = sshll.u32 %s0, 4
      %s14 = int_to_ptr.hbm [resolvable:$true] %s13
      %s15 = sshll.u32 [#allocation2], 4
      %s16 = int_to_ptr.vmem [resolvable:$true] %s15
      %18 = dma.hbm_to_vmem [thread:$0]  %s14, 256, %s16, [#allocation3]
    $region5: #{tpu_custom_call.1} parent=1 // pred_fallthru
      _
    // Predicated region
    $region6: #{tpu_custom_call.1} parent=1 // pred_check
      _
    $region7: #{tpu_custom_call.1} parent=1 // pred_check_branch
      %20 = sbr.rel (0) target = $region9
    $region8: #{tpu_custom_call.1} parent=1 // pred_region
      %22 = dma.done [#allocation3], 256
    $region9: #{tpu_custom_call.1} parent=1 // pred_fallthru
      _
    %v23 = vld [vmem:[#allocation2] sm:$0xff]
    %v24 = vld [vmem:[#allocation2 + $0x8] sm:$0xff]
    %25 = vst [vmem:[#allocation5] sm:$0xff] %v23
    %26 = vst [vmem:[#allocation5 + $0x8] sm:$0xff] %v24
    // Predicated region
    $region10: #{tpu_custom_call.1} parent=1 // pred_check
      _
    $region11: #{tpu_custom_call.1} parent=1 // pred_check_branch
      %28 = sbr.rel (0) target = $region13
    $region12: #{tpu_custom_call.1} parent=1 // pred_region
      %30 = vsyncadd [#allocation4], 0
      %s32 = sshll.u32 [#allocation5], 4
      %s33 = int_to_ptr.vmem [resolvable:$true] %s32
      %s34 = sshll.u32 %s1, 4
      %s35 = int_to_ptr.hbm [resolvable:$true] %s34
      %37 = dma.vmem_to_hbm [thread:$0]  %s33, 256, %s35, [#allocation4]
    $region13: #{tpu_custom_call.1} parent=1 // pred_fallthru
      _
    // Predicated region
    $region14: #{tpu_custom_call.1} parent=1 // pred_check
      _
    $region15: #{tpu_custom_call.1} parent=1 // pred_check_branch
      %39 = sbr.rel (0) target = $region17
    $region16: #{tpu_custom_call.1} parent=1 // pred_region
      %41 = dma.done [#allocation4], 256
    $region17: #{tpu_custom_call.1} parent=1 // pred_fallthru
      _
    %42 = vsyncpa [#allocation3], 1
    %43 = vsyncpa [#allocation4], 1

</llo_original>
